<compile_context>
chip_gen: v5e
topology: v5e:2x2
jax: 0.10.0
libtpu: 0.0.40
codegen_flags: <defaults>
</compile_context>

<pallas_src>
import jax
import jax.numpy as jnp
from jax.experimental import pallas as pl
from jax.experimental.pallas import tpu as pltpu


def _round_up(x: int, m: int) -> int:
    return (x + m - 1) // m * m


def _query_vmem_capacity():
    """Per-core VMEM bytes, or None if it cannot be queried."""
    try:
        return int(getattr(pltpu.get_tpu_info(), "vmem_capacity_bytes"))
    except Exception:
        return None


# --------------------------------------------------------------------------
# Kernel
# --------------------------------------------------------------------------
def _time_embed_kernel(t_ref, w1_ref, b1_ref, w2_ref, b2_ref, o_ref, acc_ref):
    # grid = (batch_tiles, out_col_tiles, hidden_tiles); hidden is the reduction.
    k = pl.program_id(2)

    @pl.when(k == 0)
    def _init():
        acc_ref[...] = jnp.zeros_like(acc_ref)

    # First linear, one hidden tile: (TB, dim_p) @ (dim_p, TH).
    # bf16 MXU operands, f32 accumulation.  (t is a bounded sinusoid embedding,
    # so the bf16 cast of the activation is numerically benign.)
    h = jnp.dot(t_ref[...], w1_ref[...], preferred_element_type=jnp.float32)
    h = h + b1_ref[...]                 # f32 bias tile, broadcasts over rows
    h = h * jax.nn.sigmoid(h)           # SiLU in f32 (sigmoid -> EUP)

    # Second linear partial product for this hidden tile, accumulated in VMEM.
    acc_ref[...] += jnp.dot(h.astype(w2_ref.dtype), w2_ref[...],
                            preferred_element_type=jnp.float32)

    @pl.when(k == pl.num_programs(2) - 1)
    def _finalize():
        o_ref[...] = (acc_ref[...] + b2_ref[...]).astype(o_ref.dtype)


# --------------------------------------------------------------------------
# One-time parameter preparation (pad + cast).  Do NOT call per forward step.
# --------------------------------------------------------------------------
def prepare_time_embedding_params(w1, b1, w2, b2, *, weight_dtype=jnp.bfloat16):
    """Pad weights to 128-aligned shapes and cast to the MXU dtype once.

    Zero padding is numerically exact: padded input features, W rows/cols and
    biases are all zero, and SiLU(0) == 0.
    """
    dim, hidden = w1.shape
    assert w2.shape == (hidden, dim)
    assert b1.shape == (hidden,) and b2.shape == (dim,)

    dim_p = _round_up(dim, 128)
    hidden_p = _round_up(hidden, 128)

    def pad2(a, r, c):
        return jnp.pad(a, ((0, r - a.shape[0]), (0, c - a.shape[1])))

    w1_p = pad2(jnp.asarray(w1), dim_p, hidden_p).astype(weight_dtype)
    w2_p = pad2(jnp.asarray(w2), hidden_p, dim_p).astype(weight_dtype)
    b1_p = jnp.pad(jnp.asarray(b1), (0, hidden_p - hidden)
                   ).reshape(1, hidden_p).astype(jnp.float32)
    b2_p = jnp.pad(jnp.asarray(b2), (0, dim_p - dim)
                   ).reshape(1, dim_p).astype(jnp.float32)
    return {"w1": w1_p, "b1": b1_p, "w2": w2_p, "b2": b2_p,
            "dim": dim, "hidden": hidden}


# --------------------------------------------------------------------------
# Forward
# --------------------------------------------------------------------------
def time_embedding(t, params):
    """Fused TimeEmbedding forward:  silu(t @ W1 + b1) @ W2 + b2.

    t      : (B, dim)
    params : output of prepare_time_embedding_params (padded bf16 weights)
    returns (B, dim) with t.dtype
    """
    dim, hidden = params["dim"], params["hidden"]
    w1_p, b1_p, w2_p, b2_p = params["w1"], params["b1"], params["w2"], params["b2"]
    dim_p, hidden_p = w1_p.shape
    assert t.ndim == 2 and t.shape[1] == dim

    B = t.shape[0]
    out_dtype = t.dtype
    wdtype = w1_p.dtype
    wbytes = jnp.dtype(wdtype).itemsize
    obytes = jnp.dtype(out_dtype).itemsize

    # ---- generation-aware VMEM budget ------------------------------------
    cap = _query_vmem_capacity()
    cap_known = cap is not None
    if not cap_known:
        cap = 64 * 1024 * 1024          # conservative: smallest per-core VMEM (v7x)
    # ~3/4 of physical, capped at 96 MiB (leave compiler scratch/spill headroom).
    vmem_limit = max(16 * 1024 * 1024, min(cap * 3 // 4, 96 * 1024 * 1024))

    # ---- hidden tile: a 128-multiple divisor of hidden_p (no padded columns
    # are ever streamed), largest that fits double-buffered W1+W2 tiles. ----
    n128 = hidden_p // 128
    per_unit = 2 * 2 * dim_p * 128 * wbytes      # db-buffered W1+W2 per 128 cols
    weight_budget = max(per_unit, vmem_limit - 8 * 1024 * 1024)
    max_units = max(1, weight_budget // per_unit)
    units = 1
    for d in range(1, n128 + 1):
        if n128 % d == 0 and d <= max_units:
            units = d
    TH = 128 * units
    n_k = n128 // units
    weight_tile_bytes = 2 * 2 * dim_p * TH * wbytes

    # ---- batch tile: cover the full (16-row aligned) batch whenever the
    # activation buffers fit, so weights are streamed exactly once. --------
    Bp = _round_up(max(B, 1), 16)
    per_row = 2 * dim_p * wbytes + 2 * dim_p * obytes + dim_p * 4
    act_budget = max(vmem_limit - weight_tile_bytes - 2 * 1024 * 1024, 16 * per_row)
    TB = min(Bp, max(16, (act_budget // per_row) // 16 * 16))
    Bp = _round_up(Bp, TB)
    n_b = Bp // TB

    # ---- optional output-column split so the second TensorCore (v7x) has
    # work when the batch axis collapses to a single tile. -----------------
    two_core_part = cap_known and cap <= 64 * 1024 * 1024      # v7x heuristic
    n_c = 2 if (two_core_part and n_b == 1 and dim_p % 256 == 0) else 1
    TC = dim_p // n_c

    # ---- pad the (tiny) activation only ----------------------------------
    t_p = jnp.pad(t, ((0, Bp - B), (0, dim_p - dim))).astype(wdtype)

    # ---- cost hints -------------------------------------------------------
    w1_bytes = dim_p * hidden_p * wbytes
    w2_bytes = hidden_p * dim_p * wbytes
    cost = pl.CostEstimate(
        flops=2 * Bp * dim_p * hidden_p * (n_c + 1),
        bytes_accessed=(n_b * (n_c * w1_bytes + w2_bytes)
                        + Bp * dim_p * (wbytes + obytes)
                        + (hidden_p + dim_p) * 4),
        transcendentals=Bp * hidden_p * n_c,
    )

    out_p = pl.pallas_call(
        _time_embed_kernel,
        out_shape=jax.ShapeDtypeStruct((Bp, dim_p), out_dtype),
        grid_spec=pltpu.PrefetchScalarGridSpec(
            num_scalar_prefetch=0,
            grid=(n_b, n_c, n_k),
            in_specs=[
                pl.BlockSpec((TB, dim_p), lambda b, c, k: (b, 0)),   # t
                pl.BlockSpec((dim_p, TH), lambda b, c, k: (0, k)),   # W1
                pl.BlockSpec((1, TH),     lambda b, c, k: (0, k)),   # b1
                pl.BlockSpec((TH, TC),    lambda b, c, k: (k, c)),   # W2
                pl.BlockSpec((1, TC),     lambda b, c, k: (0, c)),   # b2
            ],
            out_specs=pl.BlockSpec((TB, TC), lambda b, c, k: (b, c)),
            scratch_shapes=[pltpu.VMEM((TB, TC), jnp.float32)],
        ),
        compiler_params=pltpu.CompilerParams(
            dimension_semantics=("parallel", "parallel", "arbitrary"),
            vmem_limit_bytes=int(vmem_limit),
        ),
        cost_estimate=cost,
    )(t_p, w1_p, b1_p, w2_p, b2_p)

    return out_p[:B, :dim]


def time_embedding_from_raw(t, w1, b1, w2, b2, *, weight_dtype=jnp.bfloat16):
    """Convenience path.  Prefer prepare_time_embedding_params() once + reuse."""
    return time_embedding(
        t, prepare_time_embedding_params(w1, b1, w2, b2, weight_dtype=weight_dtype))


# --------------------------------------------------------------------------
# Reference + demo
# --------------------------------------------------------------------------
def _reference(t, w1, b1, w2, b2):
    h = t.astype(jnp.float32) @ w1.astype(jnp.float32) + b1.astype(jnp.float32)
    h = h * jax.nn.sigmoid(h)
    y = h @ w2.astype(jnp.float32) + b2.astype(jnp.float32)
    return y.astype(t.dtype)


if __name__ == "__main__":
    B, DIM = 8, 32          # small demo shapes: batch=8, model dim=32 -> hidden=128
    HID = 4 * DIM

    key = jax.random.PRNGKey(0)
    k_t, k_w1, k_b1, k_w2, k_b2 = jax.random.split(key, 5)

    # Deterministic synthetic parameters (PyTorch-like uniform fan-in init).
    bound1 = 1.0 / (DIM ** 0.5)
    bound2 = 1.0 / (HID ** 0.5)
    t = jax.random.normal(k_t, (B, DIM), dtype=jnp.float32)
    w1 = jax.random.uniform(k_w1, (DIM, HID), minval=-bound1, maxval=bound1, dtype=jnp.float32)
    b1 = jax.random.uniform(k_b1, (HID,), minval=-bound1, maxval=bound1, dtype=jnp.float32)
    w2 = jax.random.uniform(k_w2, (HID, DIM), minval=-bound2, maxval=bound2, dtype=jnp.float32)
    b2 = jax.random.uniform(k_b2, (DIM,), minval=-bound2, maxval=bound2, dtype=jnp.float32)

    # Prepare (pad + bf16-cast) parameters ONCE, reuse across calls.
    params = jax.tree_util.tree_map(jax.block_until_ready,
                                    prepare_time_embedding_params(w1, b1, w2, b2))

    out = jax.block_until_ready(time_embedding(t, params))
    ref = _reference(t, w1, b1, w2, b2)

    assert out.shape == (B, DIM), out.shape
    # bf16 weights/activations on the MXU (f32 accumulation) -> relaxed tolerance.
    assert jnp.allclose(out.astype(jnp.float32), ref.astype(jnp.float32),
                        atol=5e-2, rtol=5e-2), "mismatch vs reference"
    print("KERNEL_OK")
</pallas_src>

<mosaic_0001>
module attributes {stable_mosaic.version = 11 : i64} {
  func.func @_time_embed_kernel(%arg0: i32, %arg1: i32, %arg2: i32, %arg3: memref<16x128xbf16, #tpu.memory_space<vmem>>, %arg4: memref<128x128xbf16, #tpu.memory_space<vmem>>, %arg5: memref<1x128xf32, #tpu.memory_space<vmem>>, %arg6: memref<128x128xbf16, #tpu.memory_space<vmem>>, %arg7: memref<1x128xf32, #tpu.memory_space<vmem>>, %arg8: memref<16x128xf32, #tpu.memory_space<vmem>>, %arg9: memref<16x128xf32, #tpu.memory_space<vmem>>) attributes {dimension_semantics = [#tpu.dimension_semantics<parallel>, #tpu.dimension_semantics<parallel>, #tpu.dimension_semantics<arbitrary>], iteration_bounds = array<i64: 1, 1, 1>, scalar_prefetch = 0 : i64, scratch_operands = 1 : i64, tpu.core_type = #tpu.core_type<tc>, window_params = [{transform_indices = @transform_0, window_bounds = array<i64: 16, 128>}, {transform_indices = @transform_1, window_bounds = array<i64: 128, 128>}, {transform_indices = @transform_2, window_bounds = array<i64: 1, 128>}, {transform_indices = @transform_3, window_bounds = array<i64: 128, 128>}, {transform_indices = @transform_4, window_bounds = array<i64: 1, 128>}, {transform_indices = @transform_5, window_bounds = array<i64: 16, 128>}]} {
    %c0_i32 = arith.constant 0 : i32
    %0 = arith.cmpi eq, %arg2, %c0_i32 : i32
    %1 = arith.extui %0 : i1 to i32
    %c0_i32_0 = arith.constant 0 : i32
    %2 = arith.cmpi ne, %1, %c0_i32_0 : i32
    scf.if %2 {
      %cst_16 = arith.constant 0.000000e+00 : f32
      %24 = vector.broadcast %cst_16 : f32 to vector<16x128xf32>
      %c0_17 = arith.constant 0 : index
      %c0_18 = arith.constant 0 : index
      %25 = vector.load %arg9[%c0_17, %c0_18] : memref<16x128xf32, #tpu.memory_space<vmem>>, vector<16x128xf32>
      tpu.vector_store %arg9[%c0_17, %c0_18], %24 {strides = array<i32>} : memref<16x128xf32, #tpu.memory_space<vmem>>, vector<16x128xf32>,
    } else {
    }
    %c0 = arith.constant 0 : index
    %c0_1 = arith.constant 0 : index
    %3 = vector.load %arg3[%c0, %c0_1] : memref<16x128xbf16, #tpu.memory_space<vmem>>, vector<16x128xbf16>
    %c0_2 = arith.constant 0 : index
    %c0_3 = arith.constant 0 : index
    %4 = vector.load %arg4[%c0_2, %c0_3] : memref<128x128xbf16, #tpu.memory_space<vmem>>, vector<128x128xbf16>
    %cst = arith.constant dense<0.000000e+00> : vector<16x128xf32>
    %5 = tpu.matmul %3, %4, %cst {dimension_numbers = #tpu.dot_dimension_numbers<[1], [0], [0], [1], [0, 0, 1, 1], [], []>} : vector<16x128xbf16>, vector<128x128xbf16>, vector<16x128xf32> -> vector<16x128xf32>
    %c0_4 = arith.constant 0 : index
    %c0_5 = arith.constant 0 : index
    %6 = vector.load %arg5[%c0_4, %c0_5] : memref<1x128xf32, #tpu.memory_space<vmem>>, vector<1x128xf32>
    %7 = vector.broadcast %6 : vector<1x128xf32> to vector<16x128xf32>
    %8 = arith.addf %5, %7 : vector<16x128xf32>
    %9 = arith.negf %8 : vector<16x128xf32>
    %10 = math.exp %9 : vector<16x128xf32>
    %cst_6 = arith.constant 1.000000e+00 : f32
    %11 = vector.broadcast %cst_6 : f32 to vector<16x128xf32>
    %12 = arith.addf %11, %10 : vector<16x128xf32>
    %13 = arith.divf %11, %12 : vector<16x128xf32>
    %14 = arith.mulf %8, %13 : vector<16x128xf32>
    %c0_7 = arith.constant 0 : index
    %c0_8 = arith.constant 0 : index
    %15 = vector.load %arg9[%c0_7, %c0_8] : memref<16x128xf32, #tpu.memory_space<vmem>>, vector<16x128xf32>
    %16 = arith.truncf %14 : vector<16x128xf32> to vector<16x128xbf16>
    %c0_9 = arith.constant 0 : index
    %c0_10 = arith.constant 0 : index
    %17 = vector.load %arg6[%c0_9, %c0_10] : memref<128x128xbf16, #tpu.memory_space<vmem>>, vector<128x128xbf16>
    %cst_11 = arith.constant dense<0.000000e+00> : vector<16x128xf32>
    %18 = tpu.matmul %16, %17, %cst_11 {dimension_numbers = #tpu.dot_dimension_numbers<[1], [0], [0], [1], [0, 0, 1, 1], [], []>} : vector<16x128xbf16>, vector<128x128xbf16>, vector<16x128xf32> -> vector<16x128xf32>
    %19 = arith.addf %15, %18 : vector<16x128xf32>
    %c0_12 = arith.constant 0 : index
    %c0_13 = arith.constant 0 : index
    %20 = vector.load %arg9[%c0_12, %c0_13] : memref<16x128xf32, #tpu.memory_space<vmem>>, vector<16x128xf32>
    tpu.vector_store %arg9[%c0_12, %c0_13], %19 {strides = array<i32>} : memref<16x128xf32, #tpu.memory_space<vmem>>, vector<16x128xf32>,
    %c0_i32_14 = arith.constant 0 : i32
    %21 = arith.cmpi eq, %arg2, %c0_i32_14 : i32
    %22 = arith.extui %21 : i1 to i32
    %c0_i32_15 = arith.constant 0 : i32
    %23 = arith.cmpi ne, %22, %c0_i32_15 : i32
    scf.if %23 {
      %c0_16 = arith.constant 0 : index
      %c0_17 = arith.constant 0 : index
      %24 = vector.load %arg9[%c0_16, %c0_17] : memref<16x128xf32, #tpu.memory_space<vmem>>, vector<16x128xf32>
      %c0_18 = arith.constant 0 : index
      %c0_19 = arith.constant 0 : index
      %25 = vector.load %arg7[%c0_18, %c0_19] : memref<1x128xf32, #tpu.memory_space<vmem>>, vector<1x128xf32>
      %26 = vector.broadcast %25 : vector<1x128xf32> to vector<16x128xf32>
      %27 = arith.addf %24, %26 : vector<16x128xf32>
      %c0_20 = arith.constant 0 : index
      %c0_21 = arith.constant 0 : index
      %28 = vector.load %arg8[%c0_20, %c0_21] : memref<16x128xf32, #tpu.memory_space<vmem>>, vector<16x128xf32>
      tpu.vector_store %arg8[%c0_20, %c0_21], %27 {strides = array<i32>} : memref<16x128xf32, #tpu.memory_space<vmem>>, vector<16x128xf32>,
    } else {
    }
    return
  }
  func.func @transform_0(%arg0: i32, %arg1: i32, %arg2: i32) -> (i32, i32) {
    %c0_i32 = arith.constant 0 : i32
    %c0_i32_0 = arith.constant 0 : i32
    return %arg0, %c0_i32 : i32, i32
  }
  func.func @transform_1(%arg0: i32, %arg1: i32, %arg2: i32) -> (i32, i32) {
    %c0_i32 = arith.constant 0 : i32
    %c0_i32_0 = arith.constant 0 : i32
    return %c0_i32, %arg2 : i32, i32
  }
  func.func @transform_2(%arg0: i32, %arg1: i32, %arg2: i32) -> (i32, i32) {
    %c0_i32 = arith.constant 0 : i32
    %c0_i32_0 = arith.constant 0 : i32
    return %c0_i32, %arg2 : i32, i32
  }
  func.func @transform_3(%arg0: i32, %arg1: i32, %arg2: i32) -> (i32, i32) {
    %c0_i32 = arith.constant 0 : i32
    return %arg2, %arg1 : i32, i32
  }
  func.func @transform_4(%arg0: i32, %arg1: i32, %arg2: i32) -> (i32, i32) {
    %c0_i32 = arith.constant 0 : i32
    %c0_i32_0 = arith.constant 0 : i32
    return %c0_i32, %arg1 : i32, i32
  }
  func.func @transform_5(%arg0: i32, %arg1: i32, %arg2: i32) -> (i32, i32) {
    %c0_i32 = arith.constant 0 : i32
    return %arg0, %arg1 : i32, i32
  }
}

</mosaic_0001>

<llo_original>
// kernel: tpu_custom_call.1
$region0: #{tpu_custom_call.1}
  #allocation0 [shape = 'u32[]', space=smem, size = 0x4, offset = 0x4, fixed_abs, tag = 'smem constant byte address 0x4 - core index']
  #allocation1 [shape = 'u32[72,128]{1,0:T(1,128)}', space=vmem, size = 0x9000, scoped, tag = 'internal scratch']
  #allocation2 [shape = 'f32[16,128]{1,0:T(8,128)}', space=vmem, size = 0x2000, scoped, tag = 'scratch operand']
  %s0 = inlined_call_operand.hbm [shape: bf16[16,128], index: 0, kind: input, shape index: {}]
  %s1 = inlined_call_operand.hbm [shape: bf16[128,128], index: 1, kind: input, shape index: {}]
  %s2 = inlined_call_operand.vmem [shape: f32[1,128], index: 2, kind: input, shape index: {}]
  %s3 = inlined_call_operand.hbm [shape: bf16[128,128], index: 3, kind: input, shape index: {}]
  %s4 = inlined_call_operand.vmem [shape: f32[1,128], index: 4, kind: input, shape index: {}]
  %s5 = inlined_call_operand.hbm [shape: f32[16,128], index: 5, kind: output, shape index: {}]
  %s6 = sld [smem:[#allocation0]]
  $region50: #{tpu_custom_call.1} parent=0
    _
  %s8 = ssub.s32 1, %s6
  %s9 = scalar_select 0, %s8, %s6
  $region1: #{tpu_custom_call.1} parent=0
    #allocation3 [shape = 'u8[4096]{0}', space=vmem, size = 0x1000, scoped, tag = 'input window, operand 0, single buffered']
    #allocation4 [shape = 's32[1]{0}', space=sflag, size = 0x4, scoped, tag = 'scoped memory for tpu_custom_call.1']
    #allocation5 [shape = 's32[1]{0}', space=sflag, size = 0x4, scoped, tag = 'scoped memory for tpu_custom_call.1']
    #allocation6 [shape = 'u8[32768]{0}', space=vmem, size = 0x8000, scoped, tag = 'input window, operand 1, single buffered']
    #allocation7 [shape = 's32[1]{0}', space=sflag, size = 0x4, scoped, tag = 'scoped memory for tpu_custom_call.1']
    #allocation8 [shape = 'u8[32768]{0}', space=vmem, size = 0x8000, scoped, tag = 'input window, operand 3, single buffered']
    #allocation9 [shape = 'u8[8192]{0}', space=vmem, size = 0x2000, scoped, tag = 'output window, operand 0, single buffered']
    %10 = vsyncpa [#allocation4], 0
    %11 = vsyncpa [#allocation7], 0
    %12 = vsyncpa [#allocation5], 0
    // Predicated region
    $region2: #{tpu_custom_call.1} parent=1 // pred_check
      _
    $region3: #{tpu_custom_call.1} parent=1 // pred_check_branch
      %14 = sbr.rel (0) target = $region5
    $region4: #{tpu_custom_call.1} parent=1 // pred_region
      %16 = vsyncadd [#allocation4], 0
      %s17 = sshll.u32 %s0, 4
      %s18 = int_to_ptr.hbm [resolvable:$true] %s17
      %s19 = sshll.u32 [#allocation3], 4
      %s20 = int_to_ptr.vmem [resolvable:$true] %s19
      %25 = dma.hbm_to_vmem [thread:$0]  %s18, 128, %s20, [#allocation4], 64, 64, 4
    $region5: #{tpu_custom_call.1} parent=1 // pred_fallthru
      _
    // Predicated region
    $region6: #{tpu_custom_call.1} parent=1 // pred_check
      _
    $region7: #{tpu_custom_call.1} parent=1 // pred_check_branch
      %27 = sbr.rel (0) target = $region9
    $region8: #{tpu_custom_call.1} parent=1 // pred_region
      %29 = vsyncadd [#allocation7], 0
      %s30 = sshll.u32 %s1, 4
      %s31 = int_to_ptr.hbm [resolvable:$true] %s30
      %s32 = sshll.u32 [#allocation6], 4
      %s33 = int_to_ptr.vmem [resolvable:$true] %s32
      %38 = dma.hbm_to_vmem [thread:$0]  %s31, 1024, %s33, [#allocation7], 64, 64, 4
    $region9: #{tpu_custom_call.1} parent=1 // pred_fallthru
      _
    // Predicated region
    $region10: #{tpu_custom_call.1} parent=1 // pred_check
      _
    $region11: #{tpu_custom_call.1} parent=1 // pred_check_branch
      %40 = sbr.rel (0) target = $region13
    $region12: #{tpu_custom_call.1} parent=1 // pred_region
      _
    $region13: #{tpu_custom_call.1} parent=1 // pred_fallthru
      _
    // Predicated region
    $region14: #{tpu_custom_call.1} parent=1 // pred_check
      _
    $region15: #{tpu_custom_call.1} parent=1 // pred_check_branch
      %42 = sbr.rel (0) target = $region17
    $region16: #{tpu_custom_call.1} parent=1 // pred_region
      %44 = vsyncadd [#allocation7], 0
      %s45 = sshll.u32 %s3, 4
      %s46 = int_to_ptr.hbm [resolvable:$true] %s45
      %s47 = sshll.u32 [#allocation8], 4
      %s48 = int_to_ptr.vmem [resolvable:$true] %s47
      %53 = dma.hbm_to_vmem [thread:$0]  %s46, 1024, %s48, [#allocation7], 64, 64, 4
    $region17: #{tpu_custom_call.1} parent=1 // pred_fallthru
      _
    // Predicated region
    $region18: #{tpu_custom_call.1} parent=1 // pred_check
      _
    $region19: #{tpu_custom_call.1} parent=1 // pred_check_branch
      %55 = sbr.rel (0) target = $region21
    $region20: #{tpu_custom_call.1} parent=1 // pred_region
      _
    $region21: #{tpu_custom_call.1} parent=1 // pred_fallthru
      _
    // Predicated region
    $region22: #{tpu_custom_call.1} parent=1 // pred_check
      _
    $region23: #{tpu_custom_call.1} parent=1 // pred_check_branch
      %57 = sbr.rel (0) target = $region25
    $region24: #{tpu_custom_call.1} parent=1 // pred_region
      %59 = dma.done [#allocation4], 128
    $region25: #{tpu_custom_call.1} parent=1 // pred_fallthru
      _
    // Predicated region
    $region26: #{tpu_custom_call.1} parent=1 // pred_check
      _
    $region27: #{tpu_custom_call.1} parent=1 // pred_check_branch
      %61 = sbr.rel (0) target = $region29
    $region28: #{tpu_custom_call.1} parent=1 // pred_region
      %63 = dma.done [#allocation7], 1024
    $region29: #{tpu_custom_call.1} parent=1 // pred_fallthru
      _
    // Predicated region
    $region30: #{tpu_custom_call.1} parent=1 // pred_check
      _
    $region31: #{tpu_custom_call.1} parent=1 // pred_check_branch
      %65 = sbr.rel (0) target = $region33
    $region32: #{tpu_custom_call.1} parent=1 // pred_region
      %67 = dma.done [#allocation7], 1024
    $region33: #{tpu_custom_call.1} parent=1 // pred_fallthru
      _
    %p68 = scmp.eq.s32.totalorder 0, 0
    // Predicated region
    $region34: #{tpu_custom_call.1} parent=1 // pred_check
      %p69 = pneg %p68
    $region35: #{tpu_custom_call.1} parent=1 // pred_check_branch
      %71 = sbr.rel (%p69) target = $region37
    $region36: #{tpu_custom_call.1} parent=1 // pred_region
      %72 = vst [vmem:[#allocation2] sm:$0xff] 0.0
      %73 = vst [vmem:[#allocation2 + $0x8] sm:$0xff] 0.0
    $region37: #{tpu_custom_call.1} parent=1 // pred_fallthru
      _
    %v74 = vld [vmem:[#allocation3] sm:$0xf]
    %v75 = vld [vmem:[#allocation3 + $0x4] sm:$0xf]
    %v76 = vld [vmem:[#allocation6] sm:$0xf]
    %v77 = vld [vmem:[#allocation6 + $0x4] sm:$0xf]
    %v78 = vld [vmem:[#allocation6 + $0x8] sm:$0xf]
    %v79 = vld [vmem:[#allocation6 + $0xc] sm:$0xf]
    %v80 = vld [vmem:[#allocation6 + $0x10] sm:$0xf]
    %v81 = vld [vmem:[#allocation6 + $0x14] sm:$0xf]
    %v82 = vld [vmem:[#allocation6 + $0x18] sm:$0xf]
    %v83 = vld [vmem:[#allocation6 + $0x1c] sm:$0xf]
    %v84 = vld [vmem:[#allocation6 + $0x20] sm:$0xf]
    %v85 = vld [vmem:[#allocation6 + $0x24] sm:$0xf]
    %v86 = vld [vmem:[#allocation6 + $0x28] sm:$0xf]
    %v87 = vld [vmem:[#allocation6 + $0x2c] sm:$0xf]
    %v88 = vld [vmem:[#allocation6 + $0x30] sm:$0xf]
    %v89 = vld [vmem:[#allocation6 + $0x34] sm:$0xf]
    %v90 = vld [vmem:[#allocation6 + $0x38] sm:$0xf]
    %v91 = vld [vmem:[#allocation6 + $0x3c] sm:$0xf]
    %v92 = vld [vmem:[%s2] sm:$0x1]
    %v94 = vperm.slane %v92, 0
    %v98 = vunpack.c.l.b16 %v74
    %v99 = vunpack.c.l.b16 %v75
    %v100 = vpack.c.b16 %v99, %v98
    %v118 = vunpack.c.l.b16 %v76
    %v119 = vunpack.c.l.b16 %v77
    %v120 = vunpack.c.l.b16 %v78
    %v121 = vunpack.c.l.b16 %v79
    %v122 = vunpack.c.l.b16 %v80
    %v123 = vunpack.c.l.b16 %v81
    %v124 = vunpack.c.l.b16 %v82
    %v125 = vunpack.c.l.b16 %v83
    %v126 = vunpack.c.l.b16 %v84
    %v127 = vunpack.c.l.b16 %v85
    %v128 = vunpack.c.l.b16 %v86
    %v129 = vunpack.c.l.b16 %v87
    %v130 = vunpack.c.l.b16 %v88
    %v131 = vunpack.c.l.b16 %v89
    %v132 = vunpack.c.l.b16 %v90
    %v133 = vunpack.c.l.b16 %v91
    %v134 = vpack.c.b16 %v119, %v118
    %v135 = vpack.c.b16 %v121, %v120
    %v136 = vpack.c.b16 %v123, %v122
    %v137 = vpack.c.b16 %v125, %v124
    %v138 = vpack.c.b16 %v127, %v126
    %v139 = vpack.c.b16 %v129, %v128
    %v140 = vpack.c.b16 %v131, %v130
    %v141 = vpack.c.b16 %v133, %v132
    %150 = vmatpush.bf16.msra.mxu0 %v141
    %151 = vmatpush.bf16.msra.mxu0 %v140
    %152 = vmatpush.bf16.msra.mxu0 %v139
    %153 = vmatpush.bf16.msra.mxu0 %v138
    %154 = vmatpush.bf16.msra.mxu0 %v137
    %155 = vmatpush.bf16.msra.mxu0 %v136
    %156 = vmatpush.bf16.msra.mxu0 %v135
    %157 = vmatpush.bf16.msra.mxu0 %v134
    %158 = vmatmul.bf16.gmra.mxu0 %v100
    %v159 = vpop.f32.mrf.mxu0
    %v160 = vadd.f32 %v94, %v159
    %v161 = vpop.f32.mrf.mxu0
    %v162 = vadd.f32 %v94, %v161
    %163 = vdwg.mxu0
    %v164 = vxor.u32 %v160, 2147483648
    %v165 = vxor.u32 %v162, 2147483648
    %v166 = vmul.f32 %v164, 1.442695
    %v167 = vpow.pop %v166
    %v168 = vmul.f32 %v165, 1.442695
    %v169 = vpow.pop %v168
    %v170 = vadd.f32 %v167, 1.0
    %v171 = vadd.f32 %v169, 1.0
    %v172 = vrcp.pop %v170
    %v173 = vmul.f32 %v170, %v172
    %v174 = vsub.f32 1.0, %v173
    %v175 = vmul.f32 %v172, %v174
    %v176 = vadd.f32 %v172, %v175
    %vm177 = vweird.f32 %v170
    %vm178 = vweird.f32 %v172
    %vm179 = vmor %vm177, %vm178
    %v180 = vsel %vm179, %v172, %v176
    %v181 = vand.u32 2147483647, %v170
    %vm182 = vcmp.eq.f32.partialorder %v181, 8.507059e+37
    %v183 = vand.u32 %v170, 2147483648
    %v184 = vor.u32 1.1754944e-38, %v183
    %v185 = vsel %vm182, %v184, %v180
    %v186 = vmul.f32 1.0, %v185
    %v187 = vrcp.pop %v171
    %v188 = vmul.f32 %v171, %v187
    %v189 = vsub.f32 1.0, %v188
    %v190 = vmul.f32 %v187, %v189
    %v191 = vadd.f32 %v187, %v190
    %vm192 = vweird.f32 %v171
    %vm193 = vweird.f32 %v187
    %vm194 = vmor %vm192, %vm193
    %v195 = vsel %vm194, %v187, %v191
    %v196 = vand.u32 2147483647, %v171
    %vm197 = vcmp.eq.f32.partialorder %v196, 8.507059e+37
    %v198 = vand.u32 %v171, 2147483648
    %v199 = vor.u32 1.1754944e-38, %v198
    %v200 = vsel %vm197, %v199, %v195
    %v201 = vmul.f32 1.0, %v200
    %v202 = vmul.f32 %v160, %v186
    %v203 = vmul.f32 %v162, %v201
    %v204 = vld [vmem:[#allocation2] sm:$0xff]
    %v205 = vld [vmem:[#allocation2 + $0x8] sm:$0xff]
    %v206 = vpack.c.bf16 %v203, %v202
    %v207 = vld [vmem:[#allocation8] sm:$0xf]
    %v208 = vld [vmem:[#allocation8 + $0x4] sm:$0xf]
    %v209 = vld [vmem:[#allocation8 + $0x8] sm:$0xf]
    %v210 = vld [vmem:[#allocation8 + $0xc] sm:$0xf]
    %v211 = vld [vmem:[#allocation8 + $0x10] sm:$0xf]
    %v212 = vld [vmem:[#allocation8 + $0x14] sm:$0xf]
    %v213 = vld [vmem:[#allocation8 + $0x18] sm:$0xf]
    %v214 = vld [vmem:[#allocation8 + $0x1c] sm:$0xf]
    %v215 = vld [vmem:[#allocation8 + $0x20] sm:$0xf]
    %v216 = vld [vmem:[#allocation8 + $0x24] sm:$0xf]
    %v217 = vld [vmem:[#allocation8 + $0x28] sm:$0xf]
    %v218 = vld [vmem:[#allocation8 + $0x2c] sm:$0xf]
    %v219 = vld [vmem:[#allocation8 + $0x30] sm:$0xf]
    %v220 = vld [vmem:[#allocation8 + $0x34] sm:$0xf]
    %v221 = vld [vmem:[#allocation8 + $0x38] sm:$0xf]
    %v222 = vld [vmem:[#allocation8 + $0x3c] sm:$0xf]
    %v239 = vunpack.c.l.b16 %v207
    %v240 = vunpack.c.l.b16 %v208
    %v241 = vunpack.c.l.b16 %v209
    %v242 = vunpack.c.l.b16 %v210
    %v243 = vunpack.c.l.b16 %v211
    %v244 = vunpack.c.l.b16 %v212
    %v245 = vunpack.c.l.b16 %v213
    %v246 = vunpack.c.l.b16 %v214
    %v247 = vunpack.c.l.b16 %v215
    %v248 = vunpack.c.l.b16 %v216
    %v249 = vunpack.c.l.b16 %v217
    %v250 = vunpack.c.l.b16 %v218
    %v251 = vunpack.c.l.b16 %v219
    %v252 = vunpack.c.l.b16 %v220
    %v253 = vunpack.c.l.b16 %v221
    %v254 = vunpack.c.l.b16 %v222
    %v255 = vpack.c.b16 %v240, %v239
    %v256 = vpack.c.b16 %v242, %v241
    %v257 = vpack.c.b16 %v244, %v243
    %v258 = vpack.c.b16 %v246, %v245
    %v259 = vpack.c.b16 %v248, %v247
    %v260 = vpack.c.b16 %v250, %v249
    %v261 = vpack.c.b16 %v252, %v251
    %v262 = vpack.c.b16 %v254, %v253
    %271 = vmatpush.bf16.msra.mxu0 %v262
    %272 = vmatpush.bf16.msra.mxu0 %v261
    %273 = vmatpush.bf16.msra.mxu0 %v260
    %274 = vmatpush.bf16.msra.mxu0 %v259
    %275 = vmatpush.bf16.msra.mxu0 %v258
    %276 = vmatpush.bf16.msra.mxu0 %v257
    %277 = vmatpush.bf16.msra.mxu0 %v256
    %278 = vmatpush.bf16.msra.mxu0 %v255
    %279 = vmatmul.bf16.gmra.mxu0 %v206
    %v280 = vpop.f32.mrf.mxu0
    %v281 = vadd.f32 0.0, %v280
    %v282 = vpop.f32.mrf.mxu0
    %v283 = vadd.f32 0.0, %v282
    %284 = vdwg.mxu0
    %v285 = vadd.f32 %v204, %v281
    %v286 = vadd.f32 %v205, %v283
    %287 = vst [vmem:[#allocation2] sm:$0xff] %v285
    %288 = vst [vmem:[#allocation2 + $0x8] sm:$0xff] %v286
    // Predicated region
    $region38: #{tpu_custom_call.1} parent=1 // pred_check
      %p289 = pneg %p68
    $region39: #{tpu_custom_call.1} parent=1 // pred_check_branch
      %291 = sbr.rel (%p289) target = $region41
    $region40: #{tpu_custom_call.1} parent=1 // pred_region
      %v292 = vld [vmem:[#allocation2] sm:$0xff]
      %v293 = vld [vmem:[#allocation2 + $0x8] sm:$0xff]
      %v294 = vld [vmem:[%s4] sm:$0x1]
      %v296 = vperm.slane %v294, 0
      %v298 = vadd.f32 %v292, %v296
      %v299 = vadd.f32 %v293, %v296
      %300 = vst [vmem:[#allocation9] sm:$0xff] %v298
      %301 = vst [vmem:[#allocation9 + $0x8] sm:$0xff] %v299
    $region41: #{tpu_custom_call.1} parent=1 // pred_fallthru
      _
    // Predicated region
    $region42: #{tpu_custom_call.1} parent=1 // pred_check
      _
    $region43: #{tpu_custom_call.1} parent=1 // pred_check_branch
      %303 = sbr.rel (0) target = $region45
    $region44: #{tpu_custom_call.1} parent=1 // pred_region
      %305 = vsyncadd [#allocation5], 0
      %s306 = sshll.u32 [#allocation9], 4
      %s307 = int_to_ptr.vmem [resolvable:$true] %s306
      %s308 = sshll.u32 %s5, 4
      %s309 = int_to_ptr.hbm [resolvable:$true] %s308
      %314 = dma.vmem_to_hbm [thread:$0]  %s307, 256, %s309, [#allocation5], 128, 128, 8
    $region45: #{tpu_custom_call.1} parent=1 // pred_fallthru
      _
    // Predicated region
    $region46: #{tpu_custom_call.1} parent=1 // pred_check
      _
    $region47: #{tpu_custom_call.1} parent=1 // pred_check_branch
      %316 = sbr.rel (0) target = $region49
    $region48: #{tpu_custom_call.1} parent=1 // pred_region
      %318 = dma.done [#allocation5], 256
    $region49: #{tpu_custom_call.1} parent=1 // pred_fallthru
      _
    %319 = vsyncpa [#allocation4], 1
    %320 = vsyncpa [#allocation7], 1
    %321 = vsyncpa [#allocation5], 1

</llo_original>
